<compile_context>
chip_gen: v7x
topology: tpu7x:2x2x1
jax: 0.10.0
libtpu: 0.0.40
codegen_flags: <defaults>
</compile_context>

<pallas_src>
import functools

import jax
import jax.numpy as jnp
from jax.experimental import pallas as pl
from jax.experimental.pallas import tpu as pltpu


# ---------------------------------------------------------------------------
# Fused single-pass kernel: one (Bt, C, HW) activation tile per grid step.
# ---------------------------------------------------------------------------
def _fused_kernel(x_ref, w1a_ref, w1b_ref, w2_ref, o_ref):
    x = x_ref[...]                                    # (Bt, C, HW)
    xf = x.astype(jnp.float32)

    # AdaptiveAvg/MaxPool -> reduce over the flattened spatial (lane) axis.
    y_avg = jnp.mean(xf, axis=-1)                     # (Bt, C)
    y_max = jnp.max(xf, axis=-1)                      # (Bt, C)

    # concat([y_avg, y_max]) @ W1 == y_avg @ W1[:C] + y_max @ W1[C:]  (no lane concat).
    h = (jnp.dot(y_avg, w1a_ref[...], preferred_element_type=jnp.float32)
         + jnp.dot(y_max, w1b_ref[...], preferred_element_type=jnp.float32))
    h = jnp.maximum(h, 0.0)
    s = jax.nn.sigmoid(jnp.dot(h, w2_ref[...], preferred_element_type=jnp.float32))

    # Broadcast the per-(b, c) gate over the spatial (lane) axis.
    o_ref[...] = (xf * s[:, :, None]).astype(o_ref.dtype)


# ---------------------------------------------------------------------------
# Fallback (feature map too large for VMEM): two-pass, spatially chunked.
# ---------------------------------------------------------------------------
def _reduce_gate_kernel(x_ref, w1a_ref, w1b_ref, w2_ref, s_ref, sum_sc, max_sc,
                        *, hw, hw_tile):
    # Grid = (B, n_hw_chunks); accumulate sum/max per batch element, emit gate at the end.
    j = pl.program_id(1)
    x = x_ref[...].astype(jnp.float32)                # (1, C, HWt)

    if hw % hw_tile:                                  # static: mask padded lanes of last chunk
        lane = jax.lax.broadcasted_iota(jnp.int32, x.shape, 2)
        valid = (j * hw_tile + lane) < hw
        x_sum = jnp.where(valid, x, 0.0)
        x_max = jnp.where(valid, x, -jnp.inf)
    else:
        x_sum = x
        x_max = x

    part_sum = jnp.sum(x_sum, axis=-1)                # (1, C)
    part_max = jnp.max(x_max, axis=-1)                # (1, C)

    @pl.when(j == 0)
    def _():
        sum_sc[...] = part_sum
        max_sc[...] = part_max

    @pl.when(j > 0)
    def _():
        sum_sc[...] = sum_sc[...] + part_sum
        max_sc[...] = jnp.maximum(max_sc[...], part_max)

    @pl.when(j == pl.num_programs(1) - 1)
    def _():
        y_avg = sum_sc[...] * (1.0 / hw)
        h = (jnp.dot(y_avg, w1a_ref[...], preferred_element_type=jnp.float32)
             + jnp.dot(max_sc[...], w1b_ref[...], preferred_element_type=jnp.float32))
        h = jnp.maximum(h, 0.0)
        s = jax.nn.sigmoid(jnp.dot(h, w2_ref[...], preferred_element_type=jnp.float32))
        s_ref[...] = s[:, None, :]                    # (1, 1, C)


def _gate_mul_kernel(s_ref, x_ref, o_ref):
    s = s_ref[...]                                    # (1, 1, C)
    x = x_ref[...]                                    # (1, C, HWt)
    gate = s[0, 0, :][None, :, None]                  # (1, C, 1)
    o_ref[...] = (x.astype(jnp.float32) * gate).astype(o_ref.dtype)


# ---------------------------------------------------------------------------
# Planning helpers (generation-aware VMEM budget + batch-tile picker).
# ---------------------------------------------------------------------------
def _hw_plan():
    """Returns (vmem_limit_bytes, target_grid_steps, is_v5e); conservative on failure."""
    try:
        phys = int(pltpu.get_tpu_info().vmem_capacity_bytes)
    except Exception:
        phys = 64 * 1024 * 1024                       # assume smallest (v7x-class) part
    if phys <= 64 * 1024 * 1024:                      # v7x: 64 MiB physical per TC
        vmem_limit = max(16 * 1024 * 1024, (phys * 3) // 4)
    else:                                             # v5e / v6e: 128 MiB physical
        vmem_limit = 96 * 1024 * 1024
    try:
        kind = jax.devices()[0].device_kind.lower()
    except Exception:
        kind = ""
    is_v5e = ("v5 lite" in kind) or ("v5e" in kind) or ("v5litepod" in kind)
    # >= 4 steps per TensorCore; a 'parallel' batch axis is split across 2 TCs on v7x.
    target_steps = 8
    return vmem_limit, target_steps, is_v5e


def _pick_batch_tile(B, bytes_per_elem, vmem_limit, target_steps, in_bufs):
    """Largest batch tile whose pipelined buffers fit the VMEM budget, kept small enough
    that the grid has >= target_steps steps and each tile stays <= ~4 MiB (measured tiling
    data: ~1 MiB tiles already hit ~85% of HBM roofline).  Returns None if even a single
    batch element does not fit (caller uses the spatially-chunked two-pass path)."""
    budget = vmem_limit - 2 * 1024 * 1024             # headroom for weights/compiler scratch
    per_elem = (in_bufs + 2) * bytes_per_elem         # in_bufs x input + 2 x output buffers
    if per_elem > budget:
        return None
    bt_vmem = budget // per_elem
    bt_tile = max(1, (4 * 1024 * 1024) // bytes_per_elem)
    bt_steps = max(1, pl.cdiv(B, target_steps))
    return int(max(1, min(bt_vmem, bt_tile, bt_steps, B)))


# ---------------------------------------------------------------------------
# pallas_call wrappers.
# ---------------------------------------------------------------------------
def _fused_call(x3, w1a, w1b, w2, bt, vmem_limit, is_v5e):
    B, C, HW = x3.shape
    hid = w1a.shape[1]
    grid = (pl.cdiv(B, bt),)                          # padded trailing batch block is OK

    x_spec = pl.BlockSpec((bt, C, HW), lambda b: (b, 0, 0))
    if is_v5e:
        # v5e: third input buffer smooths copy-in jitter on the slower HBM.
        try:
            x_spec = pl.BlockSpec((bt, C, HW), lambda b: (b, 0, 0),
                                  pipeline_mode=pl.Buffered(3))
        except Exception:
            pass

    return pl.pallas_call(
        _fused_kernel,
        out_shape=jax.ShapeDtypeStruct((B, C, HW), x3.dtype),
        grid_spec=pltpu.PrefetchScalarGridSpec(
            num_scalar_prefetch=0,
            grid=grid,
            in_specs=[
                x_spec,
                pl.BlockSpec((C, hid), lambda b: (0, 0)),   # W1 avg half, resident
                pl.BlockSpec((C, hid), lambda b: (0, 0)),   # W1 max half, resident
                pl.BlockSpec((hid, C), lambda b: (0, 0)),   # W2, resident
            ],
            out_specs=pl.BlockSpec((bt, C, HW), lambda b: (b, 0, 0)),
        ),
        compiler_params=pltpu.CompilerParams(
            dimension_semantics=("parallel",),
            vmem_limit_bytes=vmem_limit,
        ),
    )(x3, w1a, w1b, w2)


def _two_pass_call(x3, w1a, w1b, w2, vmem_limit, hw_tile=None):
    B, C, HW = x3.shape
    hid = w1a.shape[1]
    itemsize = x3.dtype.itemsize
    budget = vmem_limit - 2 * 1024 * 1024

    if hw_tile is None:
        # Pass 2 is the tight constraint: 2 input + 2 output buffers of (1, C, HWt).
        hwt = budget // (4 * C * itemsize)
        hwt = min(hwt, max(128, (4 * 1024 * 1024) // (C * itemsize)))
        hwt = max(128, (hwt // 128) * 128)
        hwt = min(hwt, HW)
    else:
        hwt = min(hw_tile, HW)
    assert 4 * C * hwt * itemsize <= budget, (
        "MaxSELayer: a single spatial chunk does not fit the VMEM budget")
    n_hw = pl.cdiv(HW, hwt)

    # Pass 1: streaming sum/max over spatial chunks, gate MLP on the final chunk.
    gate = pl.pallas_call(
        functools.partial(_reduce_gate_kernel, hw=HW, hw_tile=hwt),
        out_shape=jax.ShapeDtypeStruct((B, 1, C), jnp.float32),
        grid_spec=pltpu.PrefetchScalarGridSpec(
            num_scalar_prefetch=0,
            grid=(B, n_hw),
            in_specs=[
                pl.BlockSpec((1, C, hwt), lambda b, j: (b, 0, j)),
                pl.BlockSpec((C, hid), lambda b, j: (0, 0)),
                pl.BlockSpec((C, hid), lambda b, j: (0, 0)),
                pl.BlockSpec((hid, C), lambda b, j: (0, 0)),
            ],
            out_specs=pl.BlockSpec((1, 1, C), lambda b, j: (b, 0, 0)),
            scratch_shapes=[pltpu.VMEM((1, C), jnp.float32),
                            pltpu.VMEM((1, C), jnp.float32)],
        ),
        compiler_params=pltpu.CompilerParams(
            dimension_semantics=("parallel", "arbitrary"),
            vmem_limit_bytes=vmem_limit,
        ),
    )(x3, w1a, w1b, w2)

    # Pass 2: apply the per-(b, c) gate to each spatial chunk.
    return pl.pallas_call(
        _gate_mul_kernel,
        out_shape=jax.ShapeDtypeStruct((B, C, HW), x3.dtype),
        grid_spec=pltpu.PrefetchScalarGridSpec(
            num_scalar_prefetch=0,
            grid=(B, n_hw),
            in_specs=[
                pl.BlockSpec((1, 1, C), lambda b, j: (b, 0, 0)),
                pl.BlockSpec((1, C, hwt), lambda b, j: (b, 0, j)),
            ],
            out_specs=pl.BlockSpec((1, C, hwt), lambda b, j: (b, 0, j)),
        ),
        compiler_params=pltpu.CompilerParams(
            dimension_semantics=("parallel", "parallel"),
            vmem_limit_bytes=vmem_limit,
        ),
    )(gate, x3)


def max_se_layer(x, w1, w2):
    """x: (B, C, H, W) [conv_style='Conv2d'] or (B, C, L) [conv_style='Conv1d'].
       w1: (2C, hid) == fc[0].weight.T (PyTorch Linear weight is (out, in)).
       w2: (hid, C)  == fc[2].weight.T."""
    assert x.ndim in (3, 4), "expected NCHW (Conv2d) or NCL (Conv1d) input"
    B, C = x.shape[:2]
    spatial = x.shape[2:]
    two_c, hid = w1.shape
    assert two_c == 2 * C and w2.shape == (hid, C)

    x3 = x.reshape(B, C, -1)                          # flatten spatial onto the lane axis
    HW = x3.shape[-1]
    w1a = w1[:C]                                      # multiplies the avg-pooled descriptor
    w1b = w1[C:]                                      # multiplies the max-pooled descriptor

    vmem_limit, target_steps, is_v5e = _hw_plan()
    in_bufs = 3 if is_v5e else 2
    bytes_per_elem = C * HW * x.dtype.itemsize
    bt = _pick_batch_tile(B, bytes_per_elem, vmem_limit, target_steps, in_bufs)

    if bt is not None:
        out = _fused_call(x3, w1a, w1b, w2, bt, vmem_limit, is_v5e)
    else:
        out = _two_pass_call(x3, w1a, w1b, w2, vmem_limit)
    return out.reshape((B, C) + spatial)


def max_se_reference(x, w1, w2):
    # Pure-JAX reference mirroring the PyTorch forward.
    red_axes = tuple(range(2, x.ndim))
    y_avg = jnp.mean(x, axis=red_axes)
    y_max = jnp.max(x, axis=red_axes)
    y = jnp.concatenate([y_avg, y_max], axis=1)
    h = jnp.maximum(y @ w1, 0.0)
    s = jax.nn.sigmoid(h @ w2)
    return x * s.reshape(s.shape + (1,) * (x.ndim - 2))


if __name__ == "__main__":
    # Small shapes consistent with the module: channel=128, reduction=16 -> hidden=8,
    # 16x16 spatial so the lane dim of the activation tile is 256 (lane-dense stores).
    B, C, H, W = 4, 128, 16, 16
    reduction = 16
    hid = C // reduction

    key = jax.random.PRNGKey(0)
    kx, k1, k2 = jax.random.split(key, 3)
    x = jax.random.normal(kx, (B, C, H, W), dtype=jnp.float32)
    # PyTorch Linear weights are (out, in); stored pre-transposed as (in, out).
    w1 = 0.1 * jax.random.normal(k1, (2 * C, hid), dtype=jnp.float32)
    w2 = 0.1 * jax.random.normal(k2, (hid, C), dtype=jnp.float32)

    ref = max_se_reference(x, w1, w2)

    # Main path (fused single-pass kernel).
    out = jax.block_until_ready(max_se_layer(x, w1, w2))
    assert out.shape == (B, C, H, W)
    assert jnp.allclose(out, ref, atol=1e-5, rtol=1e-5), "fused path mismatch"

    vmem_limit, _, is_v5e = _hw_plan()
    w1a, w1b = w1[:C], w1[C:]

    # Padded trailing batch block (Bt does not divide B; grid uses pl.cdiv).
    out_pad = _fused_call(x.reshape(B, C, H * W), w1a, w1b, w2,
                          bt=3, vmem_limit=vmem_limit, is_v5e=is_v5e)
    out_pad = jax.block_until_ready(out_pad).reshape(B, C, H, W)
    assert jnp.allclose(out_pad, ref, atol=1e-5, rtol=1e-5), "padded-batch path mismatch"

    # Spatially-chunked two-pass fallback (used when one batch element exceeds the VMEM
    # budget), exercising a masked partial final spatial chunk (20*20 = 400, tile 128).
    B2, H2, W2 = 2, 20, 20
    x2 = jax.random.normal(kx, (B2, C, H2, W2), dtype=jnp.float32)
    ref2 = max_se_reference(x2, w1, w2)
    out2 = _two_pass_call(x2.reshape(B2, C, H2 * W2), w1a, w1b, w2,
                          vmem_limit=vmem_limit, hw_tile=128)
    out2 = jax.block_until_ready(out2).reshape(B2, C, H2, W2)
    assert jnp.allclose(out2, ref2, atol=1e-5, rtol=1e-5), "two-pass path mismatch"

    # Conv1d style (3-D input).
    x1d = jax.random.normal(kx, (2, C, 64), dtype=jnp.float32)
    ref1d = max_se_reference(x1d, w1, w2)
    out1d = jax.block_until_ready(max_se_layer(x1d, w1, w2))
    assert jnp.allclose(out1d, ref1d, atol=1e-5, rtol=1e-5), "Conv1d path mismatch"

    print("KERNEL_OK")
</pallas_src>

<mosaic_0001>
module attributes {stable_mosaic.version = 11 : i64} {
  func.func @_fused_kernel(%arg0: i32, %arg1: memref<1x128x256xf32, #tpu.memory_space<vmem>>, %arg2: memref<128x8xf32, #tpu.memory_space<vmem>>, %arg3: memref<128x8xf32, #tpu.memory_space<vmem>>, %arg4: memref<8x128xf32, #tpu.memory_space<vmem>>, %arg5: memref<1x128x256xf32, #tpu.memory_space<vmem>>) attributes {dimension_semantics = [#tpu.dimension_semantics<parallel>], iteration_bounds = array<i64: 4>, scalar_prefetch = 0 : i64, scratch_operands = 0 : i64, tpu.core_type = #tpu.core_type<tc>, window_params = [{transform_indices = @transform_0, window_bounds = array<i64: 1, 128, 256>}, {pipeline_mode = #tpu.pipeline_mode<synchronous>, transform_indices = @transform_1, window_bounds = array<i64: 128, 8>}, {pipeline_mode = #tpu.pipeline_mode<synchronous>, transform_indices = @transform_2, window_bounds = array<i64: 128, 8>}, {pipeline_mode = #tpu.pipeline_mode<synchronous>, transform_indices = @transform_3, window_bounds = array<i64: 8, 128>}, {transform_indices = @transform_4, window_bounds = array<i64: 1, 128, 256>}]} {
    %c0 = arith.constant 0 : index
    %c0_0 = arith.constant 0 : index
    %c0_1 = arith.constant 0 : index
    %0 = vector.load %arg1[%c0, %c0_0, %c0_1] : memref<1x128x256xf32, #tpu.memory_space<vmem>>, vector<1x128x256xf32>
    %cst = arith.constant dense<0.000000e+00> : vector<1x128xf32>
    %1 = vector.multi_reduction <add>, %0, %cst [2] : vector<1x128x256xf32> to vector<1x128xf32>
    %cst_2 = arith.constant 2.560000e+02 : f32
    %2 = vector.broadcast %cst_2 : f32 to vector<1x128xf32>
    %3 = arith.divf %1, %2 : vector<1x128xf32>
    %cst_3 = arith.constant dense<0xFF800000> : vector<1x128xf32>
    %4 = vector.multi_reduction <maximumf>, %0, %cst_3 [2] : vector<1x128x256xf32> to vector<1x128xf32>
    %c0_4 = arith.constant 0 : index
    %c0_5 = arith.constant 0 : index
    %5 = vector.load %arg2[%c0_4, %c0_5] : memref<128x8xf32, #tpu.memory_space<vmem>>, vector<128x8xf32>
    %cst_6 = arith.constant dense<0.000000e+00> : vector<1x8xf32>
    %6 = tpu.matmul %3, %5, %cst_6 {dimension_numbers = #tpu.dot_dimension_numbers<[1], [0], [0], [1], [0, 0, 1, 1], [], []>} : vector<1x128xf32>, vector<128x8xf32>, vector<1x8xf32> -> vector<1x8xf32>
    %c0_7 = arith.constant 0 : index
    %c0_8 = arith.constant 0 : index
    %7 = vector.load %arg3[%c0_7, %c0_8] : memref<128x8xf32, #tpu.memory_space<vmem>>, vector<128x8xf32>
    %cst_9 = arith.constant dense<0.000000e+00> : vector<1x8xf32>
    %8 = tpu.matmul %4, %7, %cst_9 {dimension_numbers = #tpu.dot_dimension_numbers<[1], [0], [0], [1], [0, 0, 1, 1], [], []>} : vector<1x128xf32>, vector<128x8xf32>, vector<1x8xf32> -> vector<1x8xf32>
    %9 = arith.addf %6, %8 : vector<1x8xf32>
    %cst_10 = arith.constant 0.000000e+00 : f32
    %10 = vector.broadcast %cst_10 : f32 to vector<1x8xf32>
    %11 = arith.maximumf %9, %10 : vector<1x8xf32>
    %c0_11 = arith.constant 0 : index
    %c0_12 = arith.constant 0 : index
    %12 = vector.load %arg4[%c0_11, %c0_12] : memref<8x128xf32, #tpu.memory_space<vmem>>, vector<8x128xf32>
    %cst_13 = arith.constant dense<0.000000e+00> : vector<1x128xf32>
    %13 = tpu.matmul %11, %12, %cst_13 {dimension_numbers = #tpu.dot_dimension_numbers<[1], [0], [0], [1], [0, 0, 1, 1], [], []>} : vector<1x8xf32>, vector<8x128xf32>, vector<1x128xf32> -> vector<1x128xf32>
    %14 = arith.negf %13 : vector<1x128xf32>
    %15 = math.exp %14 : vector<1x128xf32>
    %cst_14 = arith.constant 1.000000e+00 : f32
    %16 = vector.broadcast %cst_14 : f32 to vector<1x128xf32>
    %17 = arith.addf %16, %15 : vector<1x128xf32>
    %18 = arith.divf %16, %17 : vector<1x128xf32>
    %19 = vector.shape_cast %18 : vector<1x128xf32> to vector<1x128x1xf32>
    %20 = vector.broadcast %19 : vector<1x128x1xf32> to vector<1x128x256xf32>
    %21 = arith.mulf %0, %20 : vector<1x128x256xf32>
    %c0_15 = arith.constant 0 : index
    %c0_16 = arith.constant 0 : index
    %c0_17 = arith.constant 0 : index
    %22 = vector.load %arg5[%c0_15, %c0_16, %c0_17] : memref<1x128x256xf32, #tpu.memory_space<vmem>>, vector<1x128x256xf32>
    tpu.vector_store %arg5[%c0_15, %c0_16, %c0_17], %21 {strides = array<i32>} : memref<1x128x256xf32, #tpu.memory_space<vmem>>, vector<1x128x256xf32>,
    return
  }
  func.func @transform_0(%arg0: i32) -> (i32, i32, i32) {
    %c0_i32 = arith.constant 0 : i32
    %c0_i32_0 = arith.constant 0 : i32
    %c0_i32_1 = arith.constant 0 : i32
    return %arg0, %c0_i32, %c0_i32_0 : i32, i32, i32
  }
  func.func @transform_1(%arg0: i32) -> (i32, i32) {
    %c0_i32 = arith.constant 0 : i32
    %c0_i32_0 = arith.constant 0 : i32
    %c0_i32_1 = arith.constant 0 : i32
    return %c0_i32, %c0_i32_0 : i32, i32
  }
  func.func @transform_2(%arg0: i32) -> (i32, i32) {
    %c0_i32 = arith.constant 0 : i32
    %c0_i32_0 = arith.constant 0 : i32
    %c0_i32_1 = arith.constant 0 : i32
    return %c0_i32, %c0_i32_0 : i32, i32
  }
  func.func @transform_3(%arg0: i32) -> (i32, i32) {
    %c0_i32 = arith.constant 0 : i32
    %c0_i32_0 = arith.constant 0 : i32
    %c0_i32_1 = arith.constant 0 : i32
    return %c0_i32, %c0_i32_0 : i32, i32
  }
  func.func @transform_4(%arg0: i32) -> (i32, i32, i32) {
    %c0_i32 = arith.constant 0 : i32
    %c0_i32_0 = arith.constant 0 : i32
    %c0_i32_1 = arith.constant 0 : i32
    return %arg0, %c0_i32, %c0_i32_0 : i32, i32, i32
  }
}

</mosaic_0001>

<llo_original>
// kernel: tpu_custom_call.1
$region0: #{tpu_custom_call.1}
  #allocation0 [shape = 'u32[]', space=smem, size = 0x4, offset = 0x4, fixed_abs, tag = 'smem constant byte address 0x4 - core index']
  #allocation1 [shape = 'u32[144,128]{1,0:T(1,128)}', space=vmem, size = 0x12000, scoped, tag = 'internal scratch']
  %s0 = inlined_call_operand.hbm [shape: f32[4,128,256], index: 0, kind: input, shape index: {}]
  %s1 = inlined_call_operand.vmem [shape: f32[128,8], index: 1, kind: input, shape index: {}]
  %s2 = inlined_call_operand.vmem [shape: f32[128,8], index: 2, kind: input, shape index: {}]
  %s3 = inlined_call_operand.vmem [shape: f32[8,128], index: 3, kind: input, shape index: {}]
  %s4 = inlined_call_operand.hbm [shape: f32[4,128,256], index: 4, kind: output, shape index: {}]
  %s5 = sld [smem:[#allocation0]]
  $region53: #{tpu_custom_call.1} parent=0
    _
  %s7 = ssub.s32 1, %s5
  %s8 = scalar_select 0, %s7, %s5
  $region1: #{tpu_custom_call.1} parent=0
    #allocation2 [shape = 'u8[262144]{0}', space=vmem, size = 0x40000, scoped, tag = 'input window, operand 0']
    #allocation3 [shape = 's32[2]{0}', space=sflag, size = 0x8, scoped, tag = 'scoped memory for tpu_custom_call.1']
    #allocation4 [shape = 's32[2]{0}', space=sflag, size = 0x8, scoped, tag = 'scoped memory for tpu_custom_call.1']
    #allocation5 [shape = 'u8[262144]{0}', space=vmem, size = 0x40000, scoped, tag = 'output window, operand 0']
    %9 = vsyncpa [#allocation3], 0
    %s10 = scalar_lea.sflag [#allocation3], 1
    %11 = vsyncpa %s10, 0
    %12 = vsyncpa [#allocation4], 0
    %s13 = scalar_lea.sflag [#allocation4], 1
    %14 = vsyncpa %s13, 0
    loop: start=0, step=1, limit=6
    $region2: #{tpu_custom_call.1} parent=1 // loop_pre_header
      _
    $region3: #{tpu_custom_call.1} parent=1 // loop_header
      %s16 = sphi 0, %s20
      %p17 = scmp.ge.s32.totalorder %s16, 6
      %s26 = sphi 0, %s28
      %s29 = sphi 0, %s26
      %s30 = sphi 0, %s29
      %s46 = sphi 0, %s30
      %s50 = sphi 0, %s50
      %s52 = sphi 0, %s50
      %s53 = sphi 0, %s52
      %s67 = sphi 0, %s53
      %s71 = sphi 0, %s71
      %s73 = sphi 0, %s71
      %s74 = sphi 0, %s73
      %s88 = sphi 0, %s74
      %s92 = sphi 0, %s92
      %s94 = sphi 0, %s92
      %s95 = sphi 0, %s94
      %s109 = sphi 0, %s95
      %s115 = sphi 0, %s117
      %s118 = sphi 0, %s115
      %s119 = sphi 0, %s118
      %s135 = sphi 0, %s119
    $region4: #{tpu_custom_call.1} parent=1 // loop_header_branch
      %19 = sbr.rel (%p17) target = $region8
    $region5: #{tpu_custom_call.1} parent=1 // loop_body
      %s21 = ssub.s32 %s16, 1
      %s22 = ssub.s32 %s16, 2
      %s23 = sadd.s32 %s16, 1
      %s24 = ssub.s32 %s16, %s23
      %p25 = scmp.eq.s32.totalorder %s24, 0
      %s27 = sadd.s32 %s26, 1
      %s28 = scalar_select %p25, %s26, %s27
      %p31 = pneg %p25
      %p32 = scmp.eq.s32.totalorder %s16, 3
      %p33 = por %p31, %p32
      %p34 = scmp.ne.s32.totalorder %s26, %s29
      %p35 = scmp.eq.s32.totalorder %s16, 0
      %p36 = por %p34, %p35
      %p37 = scmp.ne.s32.totalorder %s26, %s29
      %p38 = scmp.eq.s32.totalorder %s21, 3
      %p39 = por %p37, %p38
      %p40 = scmp.ne.s32.totalorder %s29, %s30
      %p41 = scmp.eq.s32.totalorder %s21, 0
      %p42 = por %p40, %p41
      %p43 = scmp.ne.s32.totalorder %s29, %s30
      %p44 = scmp.eq.s32.totalorder %s22, 3
      %p45 = por %p43, %p44
      %p47 = scmp.ne.s32.totalorder %s30, %s46
      %p48 = scmp.eq.s32.totalorder %s22, 0
      %p49 = por %p47, %p48
      %s51 = sadd.s32 %s50, 1
      %p54 = scmp.eq.s32.totalorder %s16, 3
      %p55 = scmp.ne.s32.totalorder %s50, %s52
      %p56 = scmp.eq.s32.totalorder %s16, 0
      %p57 = por %p55, %p56
      %p58 = scmp.ne.s32.totalorder %s50, %s52
      %p59 = scmp.eq.s32.totalorder %s21, 3
      %p60 = por %p58, %p59
      %p61 = scmp.ne.s32.totalorder %s52, %s53
      %p62 = scmp.eq.s32.totalorder %s21, 0
      %p63 = por %p61, %p62
      %p64 = scmp.ne.s32.totalorder %s52, %s53
      %p65 = scmp.eq.s32.totalorder %s22, 3
      %p66 = por %p64, %p65
      %p68 = scmp.ne.s32.totalorder %s53, %s67
      %p69 = scmp.eq.s32.totalorder %s22, 0
      %p70 = por %p68, %p69
      %s72 = sadd.s32 %s71, 1
      %p75 = scmp.eq.s32.totalorder %s16, 3
      %p76 = scmp.ne.s32.totalorder %s71, %s73
      %p77 = scmp.eq.s32.totalorder %s16, 0
      %p78 = por %p76, %p77
      %p79 = scmp.ne.s32.totalorder %s71, %s73
      %p80 = scmp.eq.s32.totalorder %s21, 3
      %p81 = por %p79, %p80
      %p82 = scmp.ne.s32.totalorder %s73, %s74
      %p83 = scmp.eq.s32.totalorder %s21, 0
      %p84 = por %p82, %p83
      %p85 = scmp.ne.s32.totalorder %s73, %s74
      %p86 = scmp.eq.s32.totalorder %s22, 3
      %p87 = por %p85, %p86
      %p89 = scmp.ne.s32.totalorder %s74, %s88
      %p90 = scmp.eq.s32.totalorder %s22, 0
      %p91 = por %p89, %p90
      %s93 = sadd.s32 %s92, 1
      %p96 = scmp.eq.s32.totalorder %s16, 3
      %p97 = scmp.ne.s32.totalorder %s92, %s94
      %p98 = scmp.eq.s32.totalorder %s16, 0
      %p99 = por %p97, %p98
      %p100 = scmp.ne.s32.totalorder %s92, %s94
      %p101 = scmp.eq.s32.totalorder %s21, 3
      %p102 = por %p100, %p101
      %p103 = scmp.ne.s32.totalorder %s94, %s95
      %p104 = scmp.eq.s32.totalorder %s21, 0
      %p105 = por %p103, %p104
      %p106 = scmp.ne.s32.totalorder %s94, %s95
      %p107 = scmp.eq.s32.totalorder %s22, 3
      %p108 = por %p106, %p107
      %p110 = scmp.ne.s32.totalorder %s95, %s109
      %p111 = scmp.eq.s32.totalorder %s22, 0
      %p112 = por %p110, %p111
      %s113 = ssub.s32 %s16, %s23
      %p114 = scmp.eq.s32.totalorder %s113, 0
      %s116 = sadd.s32 %s115, 1
      %s117 = scalar_select %p114, %s115, %s116
      %p120 = pneg %p114
      %p121 = scmp.eq.s32.totalorder %s16, 3
      %p122 = por %p120, %p121
      %p123 = scmp.ne.s32.totalorder %s115, %s118
      %p124 = scmp.eq.s32.totalorder %s16, 0
      %p125 = por %p123, %p124
      %p126 = scmp.ne.s32.totalorder %s115, %s118
      %p127 = scmp.eq.s32.totalorder %s21, 3
      %p128 = por %p126, %p127
      %p129 = scmp.ne.s32.totalorder %s118, %s119
      %p130 = scmp.eq.s32.totalorder %s21, 0
      %p131 = por %p129, %p130
      %p132 = scmp.ne.s32.totalorder %s118, %s119
      %p133 = scmp.eq.s32.totalorder %s22, 3
      %p134 = por %p132, %p133
      %p136 = scmp.ne.s32.totalorder %s119, %s135
      %p137 = scmp.eq.s32.totalorder %s22, 0
      %p138 = por %p136, %p137
      %p139 = scmp.le.s32.totalorder 1, %s16
      %p140 = scmp.lt.s32.totalorder %s16, 5
      %p141 = pnand %p139, %p140
      %p142 = pneg %p141
      // Predicated region
      $region9: #{tpu_custom_call.1} parent=5 // pred_check
        _
      $region10: #{tpu_custom_call.1} parent=5 // pred_check_branch
        %144 = sbr.rel (%p141) target = $region12
      $region11: #{tpu_custom_call.1} parent=5 // pred_region
        %s145 = ssub.s32 %s16, 1
        // Predicated region
        $region13: #{tpu_custom_call.1} parent=11 // pred_check
          %p146 = pneg %p63
        $region14: #{tpu_custom_call.1} parent=11 // pred_check_branch
          %148 = sbr.rel (%p146) target = $region16
        $region15: #{tpu_custom_call.1} parent=11 // pred_region
          _
        $region16: #{tpu_custom_call.1} parent=11 // pred_fallthru
          _
        // Predicated region
        $region17: #{tpu_custom_call.1} parent=11 // pred_check
          %p149 = pneg %p84
        $region18: #{tpu_custom_call.1} parent=11 // pred_check_branch
          %151 = sbr.rel (%p149) target = $region20
        $region19: #{tpu_custom_call.1} parent=11 // pred_region
          _
        $region20: #{tpu_custom_call.1} parent=11 // pred_fallthru
          _
        // Predicated region
        $region21: #{tpu_custom_call.1} parent=11 // pred_check
          %p152 = pneg %p105
        $region22: #{tpu_custom_call.1} parent=11 // pred_check_branch
          %154 = sbr.rel (%p152) target = $region24
        $region23: #{tpu_custom_call.1} parent=11 // pred_region
          _
        $region24: #{tpu_custom_call.1} parent=11 // pred_fallthru
          _
      $region12: #{tpu_custom_call.1} parent=5 // pred_fallthru
        _
      %p155 = scmp.lt.s32.totalorder %s16, 4
      // Predicated region
      $region25: #{tpu_custom_call.1} parent=5 // pred_check
        %p156 = pneg %p155
      $region26: #{tpu_custom_call.1} parent=5 // pred_check_branch
        %158 = sbr.rel (%p156) target = $region28
      $region27: #{tpu_custom_call.1} parent=5 // pred_region
        // Predicated region
        $region29: #{tpu_custom_call.1} parent=27 // pred_check
          %p159 = pneg %p36
        $region30: #{tpu_custom_call.1} parent=27 // pred_check_branch
          %161 = sbr.rel (%p159) target = $region32
        $region31: #{tpu_custom_call.1} parent=27 // pred_region
          %s162 = sand.u32 %s26, 1
          %s163 = scalar_lea.sflag [#allocation3], %s162
          %s164 = sand.u32 %s26, 1
          %s165 = smul.addr %s164, 256
          %s166 = scalar_lea.vmem [#allocation2], %s165
          %s168 = ssub.s32 4096, 4096
          %169 = vsyncadd %s163, %s168
          %s170 = smul.addr %s16, 32
          %s171 = smul.addr %s170, 128
          %s172 = scalar_lea.hbm %s0, %s171
          %s173 = sshll.u32 %s166, 4
          %s174 = int_to_ptr.vmem [resolvable:$true] %s173
          %179 = dma.hbm_to_vmem [thread:$0]  %s172, 4096, %s174, %s163, 256, 256, 16
        $region32: #{tpu_custom_call.1} parent=27 // pred_fallthru
          _
      $region28: #{tpu_custom_call.1} parent=5 // pred_fallthru
        _
      %p180 = scmp.le.s32.totalorder 1, %s16
      %p181 = scmp.lt.s32.totalorder %s16, 5
      %p182 = pnand %p180, %p181
      %p183 = pneg %p182
      // Predicated region
      $region33: #{tpu_custom_call.1} parent=5 // pred_check
        _
      $region34: #{tpu_custom_call.1} parent=5 // pred_check_branch
        %185 = sbr.rel (%p182) target = $region36
      $region35: #{tpu_custom_call.1} parent=5 // pred_region
        %s186 = ssub.s32 %s16, 1
        %s187 = sand.u32 %s29, 1
        %s188 = scalar_lea.sflag [#allocation3], %s187
        %s189 = sand.u32 %s29, 1
        %s190 = smul.addr %s189, 256
        %s191 = scalar_lea.vmem [#allocation2], %s190
        // Predicated region
        $region37: #{tpu_custom_call.1} parent=35 // pred_check
          %p192 = pneg %p42
        $region38: #{tpu_custom_call.1} parent=35 // pred_check_branch
          %194 = sbr.rel (%p192) target = $region40
        $region39: #{tpu_custom_call.1} parent=35 // pred_region
          %195 = dma.done %s188, 4096
        $region40: #{tpu_custom_call.1} parent=35 // pred_fallthru
          _
        %s196 = sand.u32 %s29, 1
        %s197 = scalar_lea.sflag [#allocation3], %s196
        %s198 = sand.u32 %s29, 1
        %s199 = smul.addr %s198, 256
        %s200 = scalar_lea.vmem [#allocation2], %s199
        %p201 = pneg %p42
        %p202 = pneg %p39
        %p203 = pneg %p63
        %p204 = pneg %p60
        %p205 = pneg %p84
        %p206 = pneg %p81
        %p207 = pneg %p105
        %p208 = pneg %p102
        %p209 = pneg %p131
        %p210 = pneg %p128
        %s211 = sand.u32 %s118, 1
        %s212 = scalar_lea.sflag [#allocation4], %s211
        %s213 = sand.u32 %s118, 1
        %s214 = smul.addr %s213, 256
        %s215 = scalar_lea.vmem [#allocation5], %s214
        %v216 = vld [vmem:[%s191] sm:$0xff]
        %v217 = vld [vmem:[%s191 + $0x8] sm:$0xff]
        %v218 = vld [vmem:[%s191 + $0x10] sm:$0xff]
        %v219 = vld [vmem:[%s191 + $0x18] sm:$0xff]
        %v220 = vld [vmem:[%s191 + $0x20] sm:$0xff]
        %v221 = vld [vmem:[%s191 + $0x28] sm:$0xff]
        %v222 = vld [vmem:[%s191 + $0x30] sm:$0xff]
        %v223 = vld [vmem:[%s191 + $0x38] sm:$0xff]
        %v224 = vld [vmem:[%s191 + $0x40] sm:$0xff]
        %v225 = vld [vmem:[%s191 + $0x48] sm:$0xff]
        %v226 = vld [vmem:[%s191 + $0x50] sm:$0xff]
        %v227 = vld [vmem:[%s191 + $0x58] sm:$0xff]
        %v228 = vld [vmem:[%s191 + $0x60] sm:$0xff]
        %v229 = vld [vmem:[%s191 + $0x68] sm:$0xff]
        %v230 = vld [vmem:[%s191 + $0x70] sm:$0xff]
        %v231 = vld [vmem:[%s191 + $0x78] sm:$0xff]
        %v232 = vld [vmem:[%s191 + $0x80] sm:$0xff]
        %v233 = vld [vmem:[%s191 + $0x88] sm:$0xff]
        %v234 = vld [vmem:[%s191 + $0x90] sm:$0xff]
        %v235 = vld [vmem:[%s191 + $0x98] sm:$0xff]
        %v236 = vld [vmem:[%s191 + $0xa0] sm:$0xff]
        %v237 = vld [vmem:[%s191 + $0xa8] sm:$0xff]
        %v238 = vld [vmem:[%s191 + $0xb0] sm:$0xff]
        %v239 = vld [vmem:[%s191 + $0xb8] sm:$0xff]
        %v240 = vld [vmem:[%s191 + $0xc0] sm:$0xff]
        %v241 = vld [vmem:[%s191 + $0xc8] sm:$0xff]
        %v242 = vld [vmem:[%s191 + $0xd0] sm:$0xff]
        %v243 = vld [vmem:[%s191 + $0xd8] sm:$0xff]
        %v244 = vld [vmem:[%s191 + $0xe0] sm:$0xff]
        %v245 = vld [vmem:[%s191 + $0xe8] sm:$0xff]
        %v246 = vld [vmem:[%s191 + $0xf0] sm:$0xff]
        %v247 = vld [vmem:[%s191 + $0xf8] sm:$0xff]
        %v248 = vadd.f32 %v216, %v217
        %249 = vadd.xlane.f32.xlu0 %v248
        %v250 = vpop.xlane.xlu0 %249
        %v251 = vadd.f32 %v218, %v219
        %252 = vadd.xlane.f32.xlu0 %v251
        %v253 = vpop.xlane.xlu0 %252
        %v254 = vadd.f32 %v220, %v221
        %255 = vadd.xlane.f32.xlu0 %v254
        %v256 = vpop.xlane.xlu0 %255
        %v257 = vadd.f32 %v222, %v223
        %258 = vadd.xlane.f32.xlu0 %v257
        %v259 = vpop.xlane.xlu0 %258
        %v260 = vadd.f32 %v224, %v225
        %261 = vadd.xlane.f32.xlu0 %v260
        %v262 = vpop.xlane.xlu0 %261
        %v263 = vadd.f32 %v226, %v227
        %264 = vadd.xlane.f32.xlu0 %v263
        %v265 = vpop.xlane.xlu0 %264
        %v266 = vadd.f32 %v228, %v229
        %267 = vadd.xlane.f32.xlu0 %v266
        %v268 = vpop.xlane.xlu0 %267
        %v269 = vadd.f32 %v230, %v231
        %270 = vadd.xlane.f32.xlu0 %v269
        %v271 = vpop.xlane.xlu0 %270
        %v272 = vadd.f32 %v232, %v233
        %273 = vadd.xlane.f32.xlu0 %v272
        %v274 = vpop.xlane.xlu0 %273
        %v275 = vadd.f32 %v234, %v235
        %276 = vadd.xlane.f32.xlu0 %v275
        %v277 = vpop.xlane.xlu0 %276
        %v278 = vadd.f32 %v236, %v237
        %279 = vadd.xlane.f32.xlu0 %v278
        %v280 = vpop.xlane.xlu0 %279
        %v281 = vadd.f32 %v238, %v239
        %282 = vadd.xlane.f32.xlu0 %v281
        %v283 = vpop.xlane.xlu0 %282
        %v284 = vadd.f32 %v240, %v241
        %285 = vadd.xlane.f32.xlu0 %v284
        %v286 = vpop.xlane.xlu0 %285
        %v287 = vadd.f32 %v242, %v243
        %288 = vadd.xlane.f32.xlu0 %v287
        %v289 = vpop.xlane.xlu0 %288
        %v290 = vadd.f32 %v244, %v245
        %291 = vadd.xlane.f32.xlu0 %v290
        %v292 = vpop.xlane.xlu0 %291
        %v293 = vadd.f32 %v246, %v247
        %294 = vadd.xlane.f32.xlu0 %v293
        %v295 = vpop.xlane.xlu0 %294
        %v296 = vrcp.pop 256.0
        %v297 = vmul.f32 %v250, %v296
        %v298 = vmul.f32 %v253, %v296
        %v299 = vmul.f32 %v256, %v296
        %v300 = vmul.f32 %v259, %v296
        %v301 = vmul.f32 %v262, %v296
        %v302 = vmul.f32 %v265, %v296
        %v303 = vmul.f32 %v268, %v296
        %v304 = vmul.f32 %v271, %v296
        %v305 = vmul.f32 %v274, %v296
        %v306 = vmul.f32 %v277, %v296
        %v307 = vmul.f32 %v280, %v296
        %v308 = vmul.f32 %v283, %v296
        %v309 = vmul.f32 %v286, %v296
        %v310 = vmul.f32 %v289, %v296
        %v311 = vmul.f32 %v292, %v296
        %v312 = vmul.f32 %v295, %v296
        %v313 = vmax.f32 %v216, %v217
        %314 = vmax.xlane.f32.xlu0 %v313
        %v315 = vpop.xlane.xlu0 %314
        %v316 = vmax.f32 %v218, %v219
        %317 = vmax.xlane.f32.xlu0 %v316
        %v318 = vpop.xlane.xlu0 %317
        %v319 = vmax.f32 %v220, %v221
        %320 = vmax.xlane.f32.xlu0 %v319
        %v321 = vpop.xlane.xlu0 %320
        %v322 = vmax.f32 %v222, %v223
        %323 = vmax.xlane.f32.xlu0 %v322
        %v324 = vpop.xlane.xlu0 %323
        %v325 = vmax.f32 %v224, %v225
        %326 = vmax.xlane.f32.xlu0 %v325
        %v327 = vpop.xlane.xlu0 %326
        %v328 = vmax.f32 %v226, %v227
        %329 = vmax.xlane.f32.xlu0 %v328
        %v330 = vpop.xlane.xlu0 %329
        %v331 = vmax.f32 %v228, %v229
        %332 = vmax.xlane.f32.xlu0 %v331
        %v333 = vpop.xlane.xlu0 %332
        %v334 = vmax.f32 %v230, %v231
        %335 = vmax.xlane.f32.xlu0 %v334
        %v336 = vpop.xlane.xlu0 %335
        %v337 = vmax.f32 %v232, %v233
        %338 = vmax.xlane.f32.xlu0 %v337
        %v339 = vpop.xlane.xlu0 %338
        %v340 = vmax.f32 %v234, %v235
        %341 = vmax.xlane.f32.xlu0 %v340
        %v342 = vpop.xlane.xlu0 %341
        %v343 = vmax.f32 %v236, %v237
        %344 = vmax.xlane.f32.xlu0 %v343
        %v345 = vpop.xlane.xlu0 %344
        %v346 = vmax.f32 %v238, %v239
        %347 = vmax.xlane.f32.xlu0 %v346
        %v348 = vpop.xlane.xlu0 %347
        %v349 = vmax.f32 %v240, %v241
        %350 = vmax.xlane.f32.xlu0 %v349
        %v351 = vpop.xlane.xlu0 %350
        %v352 = vmax.f32 %v242, %v243
        %353 = vmax.xlane.f32.xlu0 %v352
        %v354 = vpop.xlane.xlu0 %353
        %v355 = vmax.f32 %v244, %v245
        %356 = vmax.xlane.f32.xlu0 %v355
        %v357 = vpop.xlane.xlu0 %356
        %v358 = vmax.f32 %v246, %v247
        %359 = vmax.xlane.f32.xlu0 %v358
        %v360 = vpop.xlane.xlu0 %359
        %v361 = vld [vmem:[%s1] sm:$0xff]
        %v362 = vld [vmem:[%s1 + $0x8] sm:$0xff]
        %v363 = vld [vmem:[%s1 + $0x10] sm:$0xff]
        %v364 = vld [vmem:[%s1 + $0x18] sm:$0xff]
        %v365 = vld [vmem:[%s1 + $0x20] sm:$0xff]
        %v366 = vld [vmem:[%s1 + $0x28] sm:$0xff]
        %v367 = vld [vmem:[%s1 + $0x30] sm:$0xff]
        %v368 = vld [vmem:[%s1 + $0x38] sm:$0xff]
        %v369 = vld [vmem:[%s1 + $0x40] sm:$0xff]
        %v370 = vld [vmem:[%s1 + $0x48] sm:$0xff]
        %v371 = vld [vmem:[%s1 + $0x50] sm:$0xff]
        %v372 = vld [vmem:[%s1 + $0x58] sm:$0xff]
        %v373 = vld [vmem:[%s1 + $0x60] sm:$0xff]
        %v374 = vld [vmem:[%s1 + $0x68] sm:$0xff]
        %v375 = vld [vmem:[%s1 + $0x70] sm:$0xff]
        %v376 = vld [vmem:[%s1 + $0x78] sm:$0xff]
        %v377 = vld [vmem:[%s2] sm:$0xff]
        %v378 = vld [vmem:[%s2 + $0x8] sm:$0xff]
        %v379 = vld [vmem:[%s2 + $0x10] sm:$0xff]
        %v380 = vld [vmem:[%s2 + $0x18] sm:$0xff]
        %v381 = vld [vmem:[%s2 + $0x20] sm:$0xff]
        %v382 = vld [vmem:[%s2 + $0x28] sm:$0xff]
        %v383 = vld [vmem:[%s2 + $0x30] sm:$0xff]
        %v384 = vld [vmem:[%s2 + $0x38] sm:$0xff]
        %v385 = vld [vmem:[%s2 + $0x40] sm:$0xff]
        %v386 = vld [vmem:[%s2 + $0x48] sm:$0xff]
        %v387 = vld [vmem:[%s2 + $0x50] sm:$0xff]
        %v388 = vld [vmem:[%s2 + $0x58] sm:$0xff]
        %v389 = vld [vmem:[%s2 + $0x60] sm:$0xff]
        %v390 = vld [vmem:[%s2 + $0x68] sm:$0xff]
        %v391 = vld [vmem:[%s2 + $0x70] sm:$0xff]
        %v392 = vld [vmem:[%s2 + $0x78] sm:$0xff]
        %v409 = vlaneseq
        %v410 = vand.u32 %v409, 127
        %v411 = vlaneseq
        %v412 = vshrl.u32 %v411, 7
        %v413 = vsub.s32 %v410, %v412
        %v414 = vrot.slane %v315, %v413
        %v415 = vadd.s32 %v410, 4294967288
        %v416 = vlaneseq
        %v417 = vshrl.u32 %v416, 7
        %v418 = vsub.s32 %v415, %v417
        %v419 = vrot.slane %v318, %v418
        %vm420 = vcmask 130112
        %v421 = vsel %vm420, %v419, %v414
        %v422 = vadd.s32 %v410, 4294967280
        %v423 = vlaneseq
        %v424 = vshrl.u32 %v423, 7
        %v425 = vsub.s32 %v422, %v424
        %v426 = vrot.slane %v321, %v425
        %vm427 = vcmask 195712
        %v428 = vsel %vm427, %v426, %v421
        %v429 = vadd.s32 %v410, 4294967272
        %v430 = vlaneseq
        %v431 = vshrl.u32 %v430, 7
        %v432 = vsub.s32 %v429, %v431
        %v433 = vrot.slane %v324, %v432
        %vm434 = vcmask 261312
        %v435 = vsel %vm434, %v433, %v428
        %v436 = vadd.s32 %v410, 4294967264
        %v437 = vlaneseq
        %v438 = vshrl.u32 %v437, 7
        %v439 = vsub.s32 %v436, %v438
        %v440 = vrot.slane %v327, %v439
        %vm441 = vcmask 326912
        %v442 = vsel %vm441, %v440, %v435
        %v443 = vadd.s32 %v410, 4294967256
        %v444 = vlaneseq
        %v445 = vshrl.u32 %v444, 7
        %v446 = vsub.s32 %v443, %v445
        %v447 = vrot.slane %v330, %v446
        %vm448 = vcmask 392512
        %v449 = vsel %vm448, %v447, %v442
        %v450 = vadd.s32 %v410, 4294967248
        %v451 = vlaneseq
        %v452 = vshrl.u32 %v451, 7
        %v453 = vsub.s32 %v450, %v452
        %v454 = vrot.slane %v333, %v453
        %vm455 = vcmask 458112
        %v456 = vsel %vm455, %v454, %v449
        %v457 = vadd.s32 %v410, 4294967240
        %v458 = vlaneseq
        %v459 = vshrl.u32 %v458, 7
        %v460 = vsub.s32 %v457, %v459
        %v461 = vrot.slane %v336, %v460
        %vm462 = vcmask 523712
        %v463 = vsel %vm462, %v461, %v456
        %v464 = vadd.s32 %v410, 4294967232
        %v465 = vlaneseq
        %v466 = vshrl.u32 %v465, 7
        %v467 = vsub.s32 %v464, %v466
        %v468 = vrot.slane %v339, %v467
        %vm469 = vcmask 589312
        %v470 = vsel %vm469, %v468, %v463
        %v471 = vadd.s32 %v410, 4294967224
        %v472 = vlaneseq
        %v473 = vshrl.u32 %v472, 7
        %v474 = vsub.s32 %v471, %v473
        %v475 = vrot.slane %v342, %v474
        %vm476 = vcmask 654912
        %v477 = vsel %vm476, %v475, %v470
        %v478 = vadd.s32 %v410, 4294967216
        %v479 = vlaneseq
        %v480 = vshrl.u32 %v479, 7
        %v481 = vsub.s32 %v478, %v480
        %v482 = vrot.slane %v345, %v481
        %vm483 = vcmask 720512
        %v484 = vsel %vm483, %v482, %v477
        %v485 = vadd.s32 %v410, 4294967208
        %v486 = vlaneseq
        %v487 = vshrl.u32 %v486, 7
        %v488 = vsub.s32 %v485, %v487
        %v489 = vrot.slane %v348, %v488
        %vm490 = vcmask 786112
        %v491 = vsel %vm490, %v489, %v484
        %v492 = vadd.s32 %v410, 4294967200
        %v493 = vlaneseq
        %v494 = vshrl.u32 %v493, 7
        %v495 = vsub.s32 %v492, %v494
        %v496 = vrot.slane %v351, %v495
        %vm497 = vcmask 851712
        %v498 = vsel %vm497, %v496, %v491
        %v499 = vadd.s32 %v410, 4294967192
        %v500 = vlaneseq
        %v501 = vshrl.u32 %v500, 7
        %v502 = vsub.s32 %v499, %v501
        %v503 = vrot.slane %v354, %v502
        %vm504 = vcmask 917312
        %v505 = vsel %vm504, %v503, %v498
        %v506 = vadd.s32 %v410, 4294967184
        %v507 = vlaneseq
        %v508 = vshrl.u32 %v507, 7
        %v509 = vsub.s32 %v506, %v508
        %v510 = vrot.slane %v357, %v509
        %vm511 = vcmask 982912
        %v512 = vsel %vm511, %v510, %v505
        %v513 = vadd.s32 %v410, 4294967176
        %v514 = vlaneseq
        %v515 = vshrl.u32 %v514, 7
        %v516 = vsub.s32 %v513, %v515
        %v517 = vrot.slane %v360, %v516
        %vm518 = vcmask 1048512
        %v519 = vsel %vm518, %v517, %v512
        %521 = vmatprep.subr.mxu0 0.0
        %522 = vmatpush1.msra.mxu0 %v377
        %523 = vmatprep.subr.mxu0 0.0
        %524 = vmatpush1.msra.mxu0 %v378
        %525 = vmatprep.subr.mxu0 0.0
        %526 = vmatpush1.msra.mxu0 %v379
        %527 = vmatprep.subr.mxu0 0.0
        %528 = vmatpush1.msra.mxu0 %v380
        %529 = vmatprep.subr.mxu0 0.0
        %530 = vmatpush1.msra.mxu0 %v381
        %531 = vmatprep.subr.mxu0 0.0
        %532 = vmatpush1.msra.mxu0 %v382
        %533 = vmatprep.subr.mxu0 0.0
        %534 = vmatpush1.msra.mxu0 %v383
        %535 = vmatprep.subr.mxu0 0.0
        %536 = vmatpush1.msra.mxu0 %v384
        %537 = vmatprep.subr.mxu0 0.0
        %538 = vmatpush1.msra.mxu0 %v385
        %539 = vmatprep.subr.mxu0 0.0
        %540 = vmatpush1.msra.mxu0 %v386
        %541 = vmatprep.subr.mxu0 0.0
        %542 = vmatpush1.msra.mxu0 %v387
        %543 = vmatprep.subr.mxu0 0.0
        %544 = vmatpush1.msra.mxu0 %v388
        %545 = vmatprep.subr.mxu0 0.0
        %546 = vmatpush1.msra.mxu0 %v389
        %547 = vmatprep.subr.mxu0 0.0
        %548 = vmatpush1.msra.mxu0 %v390
        %549 = vmatprep.subr.mxu0 0.0
        %550 = vmatpush1.msra.mxu0 %v391
        %551 = vmatprep.subr.mxu0 0.0
        %552 = vmatpush1.msra.mxu0 %v392
        %553 = vmatprep.subr.mxu0 0.0
        %554 = vmatpush1.msra.mxu0 0.0
        %555 = vmatprep.subr.mxu0 0.0
        %556 = vmatpush1.msra.mxu0 0.0
        %557 = vmatprep.subr.mxu0 0.0
        %558 = vmatpush1.msra.mxu0 0.0
        %559 = vmatprep.subr.mxu0 0.0
        %560 = vmatpush1.msra.mxu0 0.0
        %561 = vmatprep.subr.mxu0 0.0
        %562 = vmatpush1.msra.mxu0 0.0
        %563 = vmatprep.subr.mxu0 0.0
        %564 = vmatpush1.msra.mxu0 0.0
        %565 = vmatprep.subr.mxu0 0.0
        %566 = vmatpush1.msra.mxu0 0.0
        %567 = vmatprep.subr.mxu0 0.0
        %568 = vmatpush1.msra.mxu0 0.0
        %569 = vmatprep.subr.mxu0 0.0
        %570 = vmatpush1.msra.mxu0 0.0
        %571 = vmatprep.subr.mxu0 0.0
        %572 = vmatpush1.msra.mxu0 0.0
        %573 = vmatprep.subr.mxu0 0.0
        %574 = vmatpush1.msra.mxu0 0.0
        %575 = vmatprep.subr.mxu0 0.0
        %576 = vmatpush1.msra.mxu0 0.0
        %577 = vmatprep.subr.mxu0 0.0
        %578 = vmatpush1.msra.mxu0 0.0
        %579 = vmatprep.subr.mxu0 0.0
        %580 = vmatpush1.msra.mxu0 0.0
        %581 = vmatprep.subr.mxu0 0.0
        %582 = vmatpush1.msra.mxu0 0.0
        %583 = vmatprep.subr.mxu0 0.0
        %584 = vmatpush1.msra.mxu0 0.0
        %585 = vmatprep.mubr.f32.mxu0 0.0
        %586 = vmatmul.mubr.f32.gmra.mrb[0].mxu0 %v519
        %v587 = vpop.f32.mrb[0].mxu0
        %v588 = vadd.f32 0.0, %v587
        %v589 = vpop.f32.mrb[0].mxu0
        %590 = vdwg.mxu0
        %v607 = vlaneseq
        %v608 = vshrl.u32 %v607, 7
        %v609 = vsub.s32 %v410, %v608
        %v610 = vrot.slane %v297, %v609
        %v611 = vlaneseq
        %v612 = vshrl.u32 %v611, 7
        %v613 = vsub.s32 %v415, %v612
        %v614 = vrot.slane %v298, %v613
        %v615 = vsel %vm420, %v614, %v610
        %v616 = vlaneseq
        %v617 = vshrl.u32 %v616, 7
        %v618 = vsub.s32 %v422, %v617
        %v619 = vrot.slane %v299, %v618
        %v620 = vsel %vm427, %v619, %v615
        %v621 = vlaneseq
        %v622 = vshrl.u32 %v621, 7
        %v623 = vsub.s32 %v429, %v622
        %v624 = vrot.slane %v300, %v623
        %v625 = vsel %vm434, %v624, %v620
        %v626 = vlaneseq
        %v627 = vshrl.u32 %v626, 7
        %v628 = vsub.s32 %v436, %v627
        %v629 = vrot.slane %v301, %v628
        %v630 = vsel %vm441, %v629, %v625
        %v631 = vlaneseq
        %v632 = vshrl.u32 %v631, 7
        %v633 = vsub.s32 %v443, %v632
        %v634 = vrot.slane %v302, %v633
        %v635 = vsel %vm448, %v634, %v630
        %v636 = vlaneseq
        %v637 = vshrl.u32 %v636, 7
        %v638 = vsub.s32 %v450, %v637
        %v639 = vrot.slane %v303, %v638
        %v640 = vsel %vm455, %v639, %v635
        %v641 = vlaneseq
        %v642 = vshrl.u32 %v641, 7
        %v643 = vsub.s32 %v457, %v642
        %v644 = vrot.slane %v304, %v643
        %v645 = vsel %vm462, %v644, %v640
        %v646 = vlaneseq
        %v647 = vshrl.u32 %v646, 7
        %v648 = vsub.s32 %v464, %v647
        %v649 = vrot.slane %v305, %v648
        %v650 = vsel %vm469, %v649, %v645
        %v651 = vlaneseq
        %v652 = vshrl.u32 %v651, 7
        %v653 = vsub.s32 %v471, %v652
        %v654 = vrot.slane %v306, %v653
        %v655 = vsel %vm476, %v654, %v650
        %v656 = vlaneseq
        %v657 = vshrl.u32 %v656, 7
        %v658 = vsub.s32 %v478, %v657
        %v659 = vrot.slane %v307, %v658
        %v660 = vsel %vm483, %v659, %v655
        %v661 = vlaneseq
        %v662 = vshrl.u32 %v661, 7
        %v663 = vsub.s32 %v485, %v662
        %v664 = vrot.slane %v308, %v663
        %v665 = vsel %vm490, %v664, %v660
        %v666 = vlaneseq
        %v667 = vshrl.u32 %v666, 7
        %v668 = vsub.s32 %v492, %v667
        %v669 = vrot.slane %v309, %v668
        %v670 = vsel %vm497, %v669, %v665
        %v671 = vlaneseq
        %v672 = vshrl.u32 %v671, 7
        %v673 = vsub.s32 %v499, %v672
        %v674 = vrot.slane %v310, %v673
        %v675 = vsel %vm504, %v674, %v670
        %v676 = vlaneseq
        %v677 = vshrl.u32 %v676, 7
        %v678 = vsub.s32 %v506, %v677
        %v679 = vrot.slane %v311, %v678
        %v680 = vsel %vm511, %v679, %v675
        %v681 = vlaneseq
        %v682 = vshrl.u32 %v681, 7
        %v683 = vsub.s32 %v513, %v682
        %v684 = vrot.slane %v312, %v683
        %v685 = vsel %vm518, %v684, %v680
        %687 = vmatprep.subr.mxu0 0.0
        %688 = vmatpush1.msra.mxu0 %v361
        %689 = vmatprep.subr.mxu0 0.0
        %690 = vmatpush1.msra.mxu0 %v362
        %691 = vmatprep.subr.mxu0 0.0
        %692 = vmatpush1.msra.mxu0 %v363
        %693 = vmatprep.subr.mxu0 0.0
        %694 = vmatpush1.msra.mxu0 %v364
        %695 = vmatprep.subr.mxu0 0.0
        %696 = vmatpush1.msra.mxu0 %v365
        %697 = vmatprep.subr.mxu0 0.0
        %698 = vmatpush1.msra.mxu0 %v366
        %699 = vmatprep.subr.mxu0 0.0
        %700 = vmatpush1.msra.mxu0 %v367
        %701 = vmatprep.subr.mxu0 0.0
        %702 = vmatpush1.msra.mxu0 %v368
        %703 = vmatprep.subr.mxu0 0.0
        %704 = vmatpush1.msra.mxu0 %v369
        %705 = vmatprep.subr.mxu0 0.0
        %706 = vmatpush1.msra.mxu0 %v370
        %707 = vmatprep.subr.mxu0 0.0
        %708 = vmatpush1.msra.mxu0 %v371
        %709 = vmatprep.subr.mxu0 0.0
        %710 = vmatpush1.msra.mxu0 %v372
        %711 = vmatprep.subr.mxu0 0.0
        %712 = vmatpush1.msra.mxu0 %v373
        %713 = vmatprep.subr.mxu0 0.0
        %714 = vmatpush1.msra.mxu0 %v374
        %715 = vmatprep.subr.mxu0 0.0
        %716 = vmatpush1.msra.mxu0 %v375
        %717 = vmatprep.subr.mxu0 0.0
        %718 = vmatpush1.msra.mxu0 %v376
        %719 = vmatprep.subr.mxu0 0.0
        %720 = vmatpush1.msra.mxu0 0.0
        %721 = vmatprep.subr.mxu0 0.0
        %722 = vmatpush1.msra.mxu0 0.0
        %723 = vmatprep.subr.mxu0 0.0
        %724 = vmatpush1.msra.mxu0 0.0
        %725 = vmatprep.subr.mxu0 0.0
        %726 = vmatpush1.msra.mxu0 0.0
        %727 = vmatprep.subr.mxu0 0.0
        %728 = vmatpush1.msra.mxu0 0.0
        %729 = vmatprep.subr.mxu0 0.0
        %730 = vmatpush1.msra.mxu0 0.0
        %731 = vmatprep.subr.mxu0 0.0
        %732 = vmatpush1.msra.mxu0 0.0
        %733 = vmatprep.subr.mxu0 0.0
        %734 = vmatpush1.msra.mxu0 0.0
        %735 = vmatprep.subr.mxu0 0.0
        %736 = vmatpush1.msra.mxu0 0.0
        %737 = vmatprep.subr.mxu0 0.0
        %738 = vmatpush1.msra.mxu0 0.0
        %739 = vmatprep.subr.mxu0 0.0
        %740 = vmatpush1.msra.mxu0 0.0
        %741 = vmatprep.subr.mxu0 0.0
        %742 = vmatpush1.msra.mxu0 0.0
        %743 = vmatprep.subr.mxu0 0.0
        %744 = vmatpush1.msra.mxu0 0.0
        %745 = vmatprep.subr.mxu0 0.0
        %746 = vmatpush1.msra.mxu0 0.0
        %747 = vmatprep.subr.mxu0 0.0
        %748 = vmatpush1.msra.mxu0 0.0
        %749 = vmatprep.subr.mxu0 0.0
        %750 = vmatpush1.msra.mxu0 0.0
        %751 = vmatprep.mubr.f32.mxu0 0.0
        %752 = vmatmul.mubr.f32.gmra.mrb[0].mxu0 %v685
        %v753 = vpop.f32.mrb[0].mxu0
        %v754 = vadd.f32 %v588, %v753
        %v755 = vpop.f32.mrb[0].mxu0
        %756 = vdwg.mxu0
        %v757 = vmax.f32 %v754, 0.0
        %v758 = vld [vmem:[%s3] sm:$0xff]
        %vm759 = vcmask 64512
        %v761 = vsel %vm759, %v757, 0
        %763 = vmatprep.subr.mxu0 0.0
        %764 = vmatpush1.msra.mxu0 %v758
        %765 = vmatprep.subr.mxu0 0.0
        %766 = vmatpush1.msra.mxu0 0.0
        %767 = vmatprep.subr.mxu0 0.0
        %768 = vmatpush1.msra.mxu0 0.0
        %769 = vmatprep.subr.mxu0 0.0
        %770 = vmatpush1.msra.mxu0 0.0
        %771 = vmatprep.subr.mxu0 0.0
        %772 = vmatpush1.msra.mxu0 0.0
        %773 = vmatprep.subr.mxu0 0.0
        %774 = vmatpush1.msra.mxu0 0.0
        %775 = vmatprep.subr.mxu0 0.0
        %776 = vmatpush1.msra.mxu0 0.0
        %777 = vmatprep.subr.mxu0 0.0
        %778 = vmatpush1.msra.mxu0 0.0
        %779 = vmatprep.subr.mxu0 0.0
        %780 = vmatpush1.msra.mxu0 0.0
        %781 = vmatprep.subr.mxu0 0.0
        %782 = vmatpush1.msra.mxu0 0.0
        %783 = vmatprep.subr.mxu0 0.0
        %784 = vmatpush1.msra.mxu0 0.0
        %785 = vmatprep.subr.mxu0 0.0
        %786 = vmatpush1.msra.mxu0 0.0
        %787 = vmatprep.subr.mxu0 0.0
        %788 = vmatpush1.msra.mxu0 0.0
        %789 = vmatprep.subr.mxu0 0.0
        %790 = vmatpush1.msra.mxu0 0.0
        %791 = vmatprep.subr.mxu0 0.0
        %792 = vmatpush1.msra.mxu0 0.0
        %793 = vmatprep.subr.mxu0 0.0
        %794 = vmatpush1.msra.mxu0 0.0
        %795 = vmatprep.subr.mxu0 0.0
        %796 = vmatpush1.msra.mxu0 0.0
        %797 = vmatprep.subr.mxu0 0.0
        %798 = vmatpush1.msra.mxu0 0.0
        %799 = vmatprep.subr.mxu0 0.0
        %800 = vmatpush1.msra.mxu0 0.0
        %801 = vmatprep.subr.mxu0 0.0
        %802 = vmatpush1.msra.mxu0 0.0
        %803 = vmatprep.subr.mxu0 0.0
        %804 = vmatpush1.msra.mxu0 0.0
        %805 = vmatprep.subr.mxu0 0.0
        %806 = vmatpush1.msra.mxu0 0.0
        %807 = vmatprep.subr.mxu0 0.0
        %808 = vmatpush1.msra.mxu0 0.0
        %809 = vmatprep.subr.mxu0 0.0
        %810 = vmatpush1.msra.mxu0 0.0
        %811 = vmatprep.subr.mxu0 0.0
        %812 = vmatpush1.msra.mxu0 0.0
        %813 = vmatprep.subr.mxu0 0.0
        %814 = vmatpush1.msra.mxu0 0.0
        %815 = vmatprep.subr.mxu0 0.0
        %816 = vmatpush1.msra.mxu0 0.0
        %817 = vmatprep.subr.mxu0 0.0
        %818 = vmatpush1.msra.mxu0 0.0
        %819 = vmatprep.subr.mxu0 0.0
        %820 = vmatpush1.msra.mxu0 0.0
        %821 = vmatprep.subr.mxu0 0.0
        %822 = vmatpush1.msra.mxu0 0.0
        %823 = vmatprep.subr.mxu0 0.0
        %824 = vmatpush1.msra.mxu0 0.0
        %825 = vmatprep.subr.mxu0 0.0
        %826 = vmatpush1.msra.mxu0 0.0
        %827 = vmatprep.mubr.f32.mxu0 0.0
        %828 = vmatmul.mubr.f32.gmra.mrb[0].mxu0 %v761
        %v829 = vpop.f32.mrb[0].mxu0
        %v830 = vadd.f32 0.0, %v829
        %v831 = vpop.f32.mrb[0].mxu0
        %832 = vdwg.mxu0
        %v833 = vxor.u32 %v830, 2147483648
        %v834 = vmul.f32 %v833, 1.442695
        %v835 = vpow.pop %v834
        %v836 = vadd.f32 %v835, 1.0
        %v837 = vrcp.pop %v836
        %v838 = vmul.f32 1.0, %v837
        %v839 = vlaneseq
        %v840 = vshrl.u32 %v839, 7
        %v841 = vsub.s32 0, %v840
        %v842 = vrot.slane %v838, %v841
        %844 = vbcast.lane.b32.xlu0 %v842, 256
        %v845 = vpop.permute.xlu0 %844
        %s847 = sor.u32 256, 8
        %848 = vbcast.lane.b32.xlu0 %v842, %s847
        %v849 = vpop.permute.xlu0 %848
        %s851 = sor.u32 256, 16
        %852 = vbcast.lane.b32.xlu0 %v842, %s851
        %v853 = vpop.permute.xlu0 %852
        %s855 = sor.u32 256, 24
        %856 = vbcast.lane.b32.xlu0 %v842, %s855
        %v857 = vpop.permute.xlu0 %856
        %s859 = sor.u32 256, 32
        %860 = vbcast.lane.b32.xlu0 %v842, %s859
        %v861 = vpop.permute.xlu0 %860
        %s863 = sor.u32 256, 40
        %864 = vbcast.lane.b32.xlu0 %v842, %s863
        %v865 = vpop.permute.xlu0 %864
        %s867 = sor.u32 256, 48
        %868 = vbcast.lane.b32.xlu0 %v842, %s867
        %v869 = vpop.permute.xlu0 %868
        %s871 = sor.u32 256, 56
        %872 = vbcast.lane.b32.xlu0 %v842, %s871
        %v873 = vpop.permute.xlu0 %872
        %s875 = sor.u32 256, 64
        %876 = vbcast.lane.b32.xlu0 %v842, %s875
        %v877 = vpop.permute.xlu0 %876
        %s879 = sor.u32 256, 72
        %880 = vbcast.lane.b32.xlu0 %v842, %s879
        %v881 = vpop.permute.xlu0 %880
        %s883 = sor.u32 256, 80
        %884 = vbcast.lane.b32.xlu0 %v842, %s883
        %v885 = vpop.permute.xlu0 %884
        %s887 = sor.u32 256, 88
        %888 = vbcast.lane.b32.xlu0 %v842, %s887
        %v889 = vpop.permute.xlu0 %888
        %s891 = sor.u32 256, 96
        %892 = vbcast.lane.b32.xlu0 %v842, %s891
        %v893 = vpop.permute.xlu0 %892
        %s895 = sor.u32 256, 104
        %896 = vbcast.lane.b32.xlu0 %v842, %s895
        %v897 = vpop.permute.xlu0 %896
        %s899 = sor.u32 256, 112
        %900 = vbcast.lane.b32.xlu0 %v842, %s899
        %v901 = vpop.permute.xlu0 %900
        %s903 = sor.u32 256, 120
        %904 = vbcast.lane.b32.xlu0 %v842, %s903
        %v905 = vpop.permute.xlu0 %904
        %v906 = vmul.f32 %v216, %v845
        %v907 = vmul.f32 %v217, %v845
        %v908 = vmul.f32 %v218, %v849
        %v909 = vmul.f32 %v219, %v849
        %v910 = vmul.f32 %v220, %v853
        %v911 = vmul.f32 %v221, %v853
        %v912 = vmul.f32 %v222, %v857
        %v913 = vmul.f32 %v223, %v857
        %v914 = vmul.f32 %v224, %v861
        %v915 = vmul.f32 %v225, %v861
        %v916 = vmul.f32 %v226, %v865
        %v917 = vmul.f32 %v227, %v865
        %v918 = vmul.f32 %v228, %v869
        %v919 = vmul.f32 %v229, %v869
        %v920 = vmul.f32 %v230, %v873
        %v921 = vmul.f32 %v231, %v873
        %v922 = vmul.f32 %v232, %v877
        %v923 = vmul.f32 %v233, %v877
        %v924 = vmul.f32 %v234, %v881
        %v925 = vmul.f32 %v235, %v881
        %v926 = vmul.f32 %v236, %v885
        %v927 = vmul.f32 %v237, %v885
        %v928 = vmul.f32 %v238, %v889
        %v929 = vmul.f32 %v239, %v889
        %v930 = vmul.f32 %v240, %v893
        %v931 = vmul.f32 %v241, %v893
        %v932 = vmul.f32 %v242, %v897
        %v933 = vmul.f32 %v243, %v897
        %v934 = vmul.f32 %v244, %v901
        %v935 = vmul.f32 %v245, %v901
        %v936 = vmul.f32 %v246, %v905
        %v937 = vmul.f32 %v247, %v905
        %938 = vst [vmem:[%s215] sm:$0xff] %v906
        %939 = vst [vmem:[%s215 + $0x8] sm:$0xff] %v907
        %940 = vst [vmem:[%s215 + $0x10] sm:$0xff] %v908
        %941 = vst [vmem:[%s215 + $0x18] sm:$0xff] %v909
        %942 = vst [vmem:[%s215 + $0x20] sm:$0xff] %v910
        %943 = vst [vmem:[%s215 + $0x28] sm:$0xff] %v911
        %944 = vst [vmem:[%s215 + $0x30] sm:$0xff] %v912
        %945 = vst [vmem:[%s215 + $0x38] sm:$0xff] %v913
        %946 = vst [vmem:[%s215 + $0x40] sm:$0xff] %v914
        %947 = vst [vmem:[%s215 + $0x48] sm:$0xff] %v915
        %948 = vst [vmem:[%s215 + $0x50] sm:$0xff] %v916
        %949 = vst [vmem:[%s215 + $0x58] sm:$0xff] %v917
        %950 = vst [vmem:[%s215 + $0x60] sm:$0xff] %v918
        %951 = vst [vmem:[%s215 + $0x68] sm:$0xff] %v919
        %952 = vst [vmem:[%s215 + $0x70] sm:$0xff] %v920
        %953 = vst [vmem:[%s215 + $0x78] sm:$0xff] %v921
        %954 = vst [vmem:[%s215 + $0x80] sm:$0xff] %v922
        %955 = vst [vmem:[%s215 + $0x88] sm:$0xff] %v923
        %956 = vst [vmem:[%s215 + $0x90] sm:$0xff] %v924
        %957 = vst [vmem:[%s215 + $0x98] sm:$0xff] %v925
        %958 = vst [vmem:[%s215 + $0xa0] sm:$0xff] %v926
        %959 = vst [vmem:[%s215 + $0xa8] sm:$0xff] %v927
        %960 = vst [vmem:[%s215 + $0xb0] sm:$0xff] %v928
        %961 = vst [vmem:[%s215 + $0xb8] sm:$0xff] %v929
        %962 = vst [vmem:[%s215 + $0xc0] sm:$0xff] %v930
        %963 = vst [vmem:[%s215 + $0xc8] sm:$0xff] %v931
        %964 = vst [vmem:[%s215 + $0xd0] sm:$0xff] %v932
        %965 = vst [vmem:[%s215 + $0xd8] sm:$0xff] %v933
        %966 = vst [vmem:[%s215 + $0xe0] sm:$0xff] %v934
        %967 = vst [vmem:[%s215 + $0xe8] sm:$0xff] %v935
        %968 = vst [vmem:[%s215 + $0xf0] sm:$0xff] %v936
        %969 = vst [vmem:[%s215 + $0xf8] sm:$0xff] %v937
        %s970 = sand.u32 %s118, 1
        %s971 = scalar_lea.sflag [#allocation4], %s970
        %s972 = sand.u32 %s118, 1
        %s973 = smul.addr %s972, 256
        %s974 = scalar_lea.vmem [#allocation5], %s973
        // Predicated region
        $region41: #{tpu_custom_call.1} parent=35 // pred_check
          %p975 = pneg %p128
        $region42: #{tpu_custom_call.1} parent=35 // pred_check_branch
          %977 = sbr.rel (%p975) target = $region44
        $region43: #{tpu_custom_call.1} parent=35 // pred_region
          %s979 = ssub.s32 4096, 4096
          %980 = vsyncadd %s971, %s979
          %s981 = smul.addr %s21, 32
          %s982 = smul.addr %s981, 128
          %s983 = scalar_lea.hbm %s4, %s982
          %s984 = sshll.u32 %s974, 4
          %s985 = int_to_ptr.vmem [resolvable:$true] %s984
          %990 = dma.vmem_to_hbm [thread:$0]  %s985, 4096, %s983, %s971, 256, 256, 16
        $region44: #{tpu_custom_call.1} parent=35 // pred_fallthru
          _
      $region36: #{tpu_custom_call.1} parent=5 // pred_fallthru
        _
      %p991 = scmp.le.s32.totalorder 2, %s16
      // Predicated region
      $region45: #{tpu_custom_call.1} parent=5 // pred_check
        %p992 = pneg %p991
      $region46: #{tpu_custom_call.1} parent=5 // pred_check_branch
        %994 = sbr.rel (%p992) target = $region48
      $region47: #{tpu_custom_call.1} parent=5 // pred_region
        %s995 = ssub.s32 %s16, 2
        // Predicated region
        $region49: #{tpu_custom_call.1} parent=47 // pred_check
          %p996 = pneg %p134
        $region50: #{tpu_custom_call.1} parent=47 // pred_check_branch
          %998 = sbr.rel (%p996) target = $region52
        $region51: #{tpu_custom_call.1} parent=47 // pred_region
          %s999 = sand.u32 %s119, 1
          %s1000 = scalar_lea.sflag [#allocation4], %s999
          %s1001 = sand.u32 %s119, 1
          %s1002 = smul.addr %s1001, 256
          %s1003 = scalar_lea.vmem [#allocation5], %s1002
          %1004 = dma.done %s1000, 4096
        $region52: #{tpu_custom_call.1} parent=47 // pred_fallthru
          _
      $region48: #{tpu_custom_call.1} parent=5 // pred_fallthru
        _
    $region6: #{tpu_custom_call.1} parent=1 // loop_footer
      %s20 = sadd.s32 1, %s16
    $region7: #{tpu_custom_call.1} parent=1 // loop_footer_branch
      %15 = sbr.rel target = $region3
    $region8: #{tpu_custom_call.1} parent=1 // loop_exit
      _
    %1005 = vsyncpa [#allocation3], 1
    %s1006 = scalar_lea.sflag [#allocation3], 1
    %1007 = vsyncpa %s1006, 1
    %1008 = vsyncpa [#allocation4], 1
    %s1009 = scalar_lea.sflag [#allocation4], 1
    %1010 = vsyncpa %s1009, 1

</llo_original>
